<compile_context>
chip_gen: v6e
topology: v6e:2x2x1
jax: 0.10.0
libtpu: 0.0.40
codegen_flags: <defaults>
</compile_context>

<pallas_src>
import functools

import jax
import jax.numpy as jnp
import numpy as np
from jax.experimental import pallas as pl
from jax.experimental.pallas import tpu as pltpu


def _cpam_kernel(w_ref, avg_ref, max_ref, o_ref, *, k, c, g):
    """w_ref: (k,) f32 SMEM.  avg_ref/max_ref: (TB, W) VMEM with W = g*C (packed) or C.
    o_ref: (TB, L_out) VMEM (L_out == W when packed, else C + 2*pad - k + 1)."""
    pad = (k - 1) // 2
    tb, l_out = o_ref.shape

    # Fused add of the two pooled descriptors, f32 accumulation.
    x = avg_ref[...].astype(jnp.float32) + max_ref[...].astype(jnp.float32)

    # In-register zero padding on both lane ends (replaces the VMEM staging scratch).
    if pad > 0:
        z = jnp.zeros((tb, pad), jnp.float32)
        xp = jnp.concatenate([z, x, z], axis=1)
    else:
        xp = x

    # Per-row channel index, only needed when g rows are packed per lane group
    # (conv taps must not leak across packed-row boundaries).
    if g > 1:
        lane_mod = jax.lax.broadcasted_iota(jnp.int32, (tb, l_out), 1) % c

    # 1-D cross-correlation (PyTorch Conv1d does NOT flip the kernel):
    #   out[b, i] = sum_j w[j] * x_zeropad[b, i + j]  ==  sum_j w[j] * x[b, i + j - pad]
    acc = jnp.zeros((tb, l_out), jnp.float32)
    for j in range(k):  # k is small & static -> fully unrolled
        tap = xp[:, j:j + l_out]  # static in-register slice (no VMEM traffic)
        if g > 1:
            lo = pad - j          # valid iff (i % c) + j - pad in [0, c)
            hi = c + pad - j
            if lo > 0:
                tap = jnp.where(lane_mod >= lo, tap, 0.0)
            if hi < c:
                tap = jnp.where(lane_mod < hi, tap, 0.0)
        acc = acc + w_ref[j] * tap

    # exp -> EUP slot; exact f32 sigmoid, downcast only at the store.
    o_ref[...] = jax.nn.sigmoid(acc).astype(o_ref.dtype)


def _pick_block_rows(rows, lane_width):
    """Batch-tile rows: multiple of 8, ~1 MiB per (double-buffered) input buffer so
    the default scoped-VMEM budget is safe on v5e (16 MiB) / v6e / v7x (32 MiB), and
    at least 2 grid steps when rows >= 16 so both v7x TensorCores get work."""
    if rows <= 8:
        return rows
    cap = max(8, ((1 << 20) // (4 * max(lane_width, 1))) // 8 * 8)
    tb = min(cap, (rows // 8) * 8, 1024)
    if rows >= 16:
        tb = min(tb, max(8, (rows // 16) * 8))  # guarantee >=2 grid steps (v7x megacore)
    return max(8, tb)


def cpam_forward(max_pool, avg_pool, weight):
    """max_pool, avg_pool: (B, C, 1); weight: (1, 1, k) Conv1d weight.
    Returns (B, L_out, 1) in the input dtype (pass bf16 for ~2x less HBM traffic)."""
    B, C, _ = avg_pool.shape
    k = int(weight.shape[-1])
    pad = (k - 1) // 2
    l_out = C + 2 * pad - k + 1  # == C for odd k ("same" conv)
    out_dtype = avg_pool.dtype

    # Metadata-only reshapes (free): channel axis on lanes, batch on sublanes.
    avg2d = avg_pool.reshape(B, C)
    max2d = max_pool.reshape(B, C)
    w = weight.reshape(k).astype(jnp.float32)

    # Lane packing for narrow C: fold g rows into one 128-lane group (free reshape).
    g = 1
    if l_out == C and C < 128 and 128 % C == 0 and B % (128 // C) == 0:
        g = 128 // C
    rows, width = B // g, g * C
    if g > 1:
        avg2d = avg2d.reshape(rows, width)
        max2d = max2d.reshape(rows, width)
    out_w = width if g > 1 else l_out

    tb = _pick_block_rows(rows, width)
    grid = (pl.cdiv(rows, tb),)

    itemsize = jnp.dtype(out_dtype).itemsize
    cost = pl.CostEstimate(
        flops=int(2 * k * B * l_out + B * C),
        transcendentals=int(B * l_out),
        bytes_accessed=int((2 * B * C + B * l_out) * itemsize + 4 * k),
    )

    out = pl.pallas_call(
        functools.partial(_cpam_kernel, k=k, c=C, g=g),
        out_shape=jax.ShapeDtypeStruct((rows, out_w), out_dtype),
        grid=grid,
        in_specs=[
            pl.BlockSpec(memory_space=pltpu.MemorySpace.SMEM),  # conv taps -> scalars
            pl.BlockSpec((tb, width), lambda i: (i, 0)),        # avg descriptors
            pl.BlockSpec((tb, width), lambda i: (i, 0)),        # max descriptors
        ],
        out_specs=pl.BlockSpec((tb, out_w), lambda i: (i, 0)),
        compiler_params=pltpu.CompilerParams(
            dimension_semantics=("parallel",),  # free 2x on v7x's two TensorCores
        ),
        cost_estimate=cost,
    )(w, avg2d, max2d)

    # TODO(synk): for tiny-B / very-large-C shapes a second "parallel" channel-tile
    # grid axis (with per-tile conv halo) would be needed to keep both v7x cores busy.
    return out.reshape(B, l_out)[..., None]  # (B, L_out, 1), matching PyTorch (B, C, 1)


def _cpam_ref(max_pool, avg_pool, weight):
    """Pure-JAX reference mirroring the PyTorch forward (for correctness check)."""
    k = weight.shape[-1]
    pad = (k - 1) // 2
    w = weight.reshape(k).astype(jnp.float32)

    def conv1d(p):  # p: (B, C, 1) -> (B, L_out, 1)
        x = p[..., 0].astype(jnp.float32)
        xp = jnp.pad(x, ((0, 0), (pad, pad)))
        l_out = x.shape[1] + 2 * pad - k + 1
        cols = jnp.stack([xp[:, j:j + l_out] for j in range(k)], axis=-1)  # (B, L_out, k)
        return jnp.einsum("blk,k->bl", cols, w)[..., None]

    return jax.nn.sigmoid(conv1d(avg_pool) + conv1d(max_pool))


if __name__ == "__main__":
    key = jax.random.PRNGKey(0)

    # (B, C, k, dtype):
    #   lane-dense C=128; packed narrow C (g=4); non-aligned C with wider kernel;
    #   even k (L_out = C-1); bf16 I/O with packing (g=2).
    configs = [
        (2, 128, 3, jnp.float32),
        (8, 32, 3, jnp.float32),
        (4, 48, 5, jnp.float32),
        (2, 16, 4, jnp.float32),
        (16, 64, 3, jnp.bfloat16),
    ]

    for idx, (B, C, K, dt) in enumerate(configs):
        k_w, k_a, k_m = jax.random.split(jax.random.fold_in(key, idx), 3)

        # Deterministic "parameter init" for Conv1d(1, 1, K, bias=False): U(-1/sqrt(K), 1/sqrt(K))
        bound = 1.0 / np.sqrt(K)
        weight = jax.random.uniform(k_w, (1, 1, K), jnp.float32, -bound, bound)

        avg_pool = jax.random.normal(k_a, (B, C, 1), jnp.float32).astype(dt)
        max_pool = jax.random.normal(k_m, (B, C, 1), jnp.float32).astype(dt)

        out = jax.block_until_ready(cpam_forward(max_pool, avg_pool, weight))
        ref = _cpam_ref(max_pool, avg_pool, weight)

        pad = (K - 1) // 2
        assert out.shape == (B, C + 2 * pad - K + 1, 1), out.shape
        tol = 1e-5 if dt == jnp.float32 else 1e-2
        assert np.allclose(np.asarray(out, np.float32), np.asarray(ref, np.float32),
                           atol=tol, rtol=tol), (B, C, K, dt)

    print("KERNEL_OK")
</pallas_src>

<mosaic_0001>
module attributes {stable_mosaic.version = 11 : i64} {
  func.func @_cpam_kernel(%arg0: i32, %arg1: memref<3xf32, #tpu.memory_space<smem>>, %arg2: memref<2x128xf32, #tpu.memory_space<vmem>>, %arg3: memref<2x128xf32, #tpu.memory_space<vmem>>, %arg4: memref<2x128xf32, #tpu.memory_space<vmem>>) attributes {dimension_semantics = [#tpu.dimension_semantics<parallel>], iteration_bounds = array<i64: 1>, scalar_prefetch = 0 : i64, scratch_operands = 0 : i64, tpu.core_type = #tpu.core_type<tc>, window_params = [{transform_indices = @transform_0, window_bounds = array<i64: 3>}, {transform_indices = @transform_1, window_bounds = array<i64: 2, 128>}, {transform_indices = @transform_2, window_bounds = array<i64: 2, 128>}, {transform_indices = @transform_3, window_bounds = array<i64: 2, 128>}]} {
    %c0 = arith.constant 0 : index
    %c0_0 = arith.constant 0 : index
    %0 = vector.load %arg2[%c0, %c0_0] : memref<2x128xf32, #tpu.memory_space<vmem>>, vector<2x128xf32>
    %c0_1 = arith.constant 0 : index
    %c0_2 = arith.constant 0 : index
    %1 = vector.load %arg3[%c0_1, %c0_2] : memref<2x128xf32, #tpu.memory_space<vmem>>, vector<2x128xf32>
    %2 = arith.addf %0, %1 : vector<2x128xf32>
    %cst = arith.constant 0.000000e+00 : f32
    %3 = vector.broadcast %cst : f32 to vector<2x1xf32>
    %4 = tpu.concatenate %3, %2, %3 in 1 : vector<2x1xf32>, vector<2x128xf32>, vector<2x1xf32> -> vector<2x130xf32>
    %cst_3 = arith.constant 0.000000e+00 : f32
    %5 = vector.broadcast %cst_3 : f32 to vector<2x128xf32>
    %6 = vector.extract_strided_slice %4 {offsets = [0, 0], sizes = [2, 128], strides = [1, 1]} : vector<2x130xf32> to vector<2x128xf32>
    %c0_4 = arith.constant 0 : index
    %7 = memref.load %arg1[%c0_4] : memref<3xf32, #tpu.memory_space<smem>>
    %8 = vector.broadcast %7 : f32 to vector<2x128xf32>
    %9 = arith.mulf %8, %6 : vector<2x128xf32>
    %10 = arith.addf %5, %9 : vector<2x128xf32>
    %11 = vector.extract_strided_slice %4 {offsets = [0, 1], sizes = [2, 128], strides = [1, 1]} : vector<2x130xf32> to vector<2x128xf32>
    %c1 = arith.constant 1 : index
    %12 = memref.load %arg1[%c1] : memref<3xf32, #tpu.memory_space<smem>>
    %13 = vector.broadcast %12 : f32 to vector<2x128xf32>
    %14 = arith.mulf %13, %11 : vector<2x128xf32>
    %15 = arith.addf %10, %14 : vector<2x128xf32>
    %16 = vector.extract_strided_slice %4 {offsets = [0, 2], sizes = [2, 128], strides = [1, 1]} : vector<2x130xf32> to vector<2x128xf32>
    %c2 = arith.constant 2 : index
    %17 = memref.load %arg1[%c2] : memref<3xf32, #tpu.memory_space<smem>>
    %18 = vector.broadcast %17 : f32 to vector<2x128xf32>
    %19 = arith.mulf %18, %16 : vector<2x128xf32>
    %20 = arith.addf %15, %19 : vector<2x128xf32>
    %21 = arith.negf %20 : vector<2x128xf32>
    %22 = math.exp %21 : vector<2x128xf32>
    %cst_5 = arith.constant 1.000000e+00 : f32
    %23 = vector.broadcast %cst_5 : f32 to vector<2x128xf32>
    %24 = arith.addf %23, %22 : vector<2x128xf32>
    %25 = arith.divf %23, %24 : vector<2x128xf32>
    %c0_6 = arith.constant 0 : index
    %c0_7 = arith.constant 0 : index
    %26 = vector.load %arg4[%c0_6, %c0_7] : memref<2x128xf32, #tpu.memory_space<vmem>>, vector<2x128xf32>
    tpu.vector_store %arg4[%c0_6, %c0_7], %25 {strides = array<i32>} : memref<2x128xf32, #tpu.memory_space<vmem>>, vector<2x128xf32>,
    return
  }
  func.func @transform_0(%arg0: i32) -> i32 {
    %c0_i32 = arith.constant 0 : i32
    %c0_i32_0 = arith.constant 0 : i32
    return %c0_i32 : i32
  }
  func.func @transform_1(%arg0: i32) -> (i32, i32) {
    %c0_i32 = arith.constant 0 : i32
    %c0_i32_0 = arith.constant 0 : i32
    return %arg0, %c0_i32 : i32, i32
  }
  func.func @transform_2(%arg0: i32) -> (i32, i32) {
    %c0_i32 = arith.constant 0 : i32
    %c0_i32_0 = arith.constant 0 : i32
    return %arg0, %c0_i32 : i32, i32
  }
  func.func @transform_3(%arg0: i32) -> (i32, i32) {
    %c0_i32 = arith.constant 0 : i32
    %c0_i32_0 = arith.constant 0 : i32
    return %arg0, %c0_i32 : i32, i32
  }
}

</mosaic_0001>

<llo_original>
// kernel: tpu_custom_call.1
$region0: #{tpu_custom_call.1}
  #allocation0 [shape = 'u32[]', space=smem, size = 0x4, offset = 0x4, fixed_abs, tag = 'smem constant byte address 0x4 - core index']
  #allocation1 [shape = 'u32[144,128]{1,0:T(1,128)}', space=vmem, size = 0x12000, scoped, tag = 'internal scratch']
  %s0 = inlined_call_operand.hbm [shape: f32[3], index: 0, kind: input, shape index: {}]
  %s1 = inlined_call_operand.hbm [shape: f32[2,128], index: 1, kind: input, shape index: {}]
  %s2 = inlined_call_operand.vmem [shape: f32[2,128], index: 2, kind: input, shape index: {}]
  %s3 = inlined_call_operand.hbm [shape: f32[2,128], index: 3, kind: output, shape index: {}]
  %s4 = sld [smem:[#allocation0]]
  $region30: #{tpu_custom_call.1} parent=0
    _
  %s6 = ssub.s32 1, %s4
  %s7 = scalar_select 0, %s6, %s4
  $region1: #{tpu_custom_call.1} parent=0
    #allocation2 [shape = 'u8[512]{0}', space=smem, size = 0x200, scoped, tag = 'input window, operand 0, single buffered']
    #allocation3 [shape = 's32[1]{0}', space=sflag, size = 0x4, scoped, tag = 'scoped memory for tpu_custom_call.1']
    #allocation4 [shape = 's32[1]{0}', space=sflag, size = 0x4, scoped, tag = 'scoped memory for tpu_custom_call.1']
    #allocation5 [shape = 's32[1]{0}', space=sflag, size = 0x4, scoped, tag = 'scoped memory for tpu_custom_call.1']
    #allocation6 [shape = 'u8[1024]{0}', space=vmem, size = 0x400, scoped, tag = 'input window, operand 1, single buffered']
    #allocation7 [shape = 'u8[1024]{0}', space=vmem, size = 0x400, scoped, tag = 'output window, operand 0, single buffered']
    %8 = vsyncpa [#allocation5], 0
    %9 = vsyncpa [#allocation3], 0
    %10 = vsyncpa [#allocation4], 0
    // Predicated region
    $region2: #{tpu_custom_call.1} parent=1 // pred_check
      _
    $region3: #{tpu_custom_call.1} parent=1 // pred_check_branch
      %12 = sbr.rel (0) target = $region5
    $region4: #{tpu_custom_call.1} parent=1 // pred_region
      %s14 = ssub.s32 16, 16
      %15 = vsyncadd [#allocation5], %s14
      %18 = dma.hbm_to_smem %s0, 16, [#allocation2], [#allocation5]
    $region5: #{tpu_custom_call.1} parent=1 // pred_fallthru
      _
    // Predicated region
    $region6: #{tpu_custom_call.1} parent=1 // pred_check
      _
    $region7: #{tpu_custom_call.1} parent=1 // pred_check_branch
      %20 = sbr.rel (0) target = $region9
    $region8: #{tpu_custom_call.1} parent=1 // pred_region
      %s22 = ssub.s32 32, 32
      %23 = vsyncadd [#allocation3], %s22
      %s25 = sshll.u32 [#allocation6], 4
      %s26 = int_to_ptr.vmem [resolvable:$true] %s25
      %28 = dma.hbm_to_vmem [thread:$0]  %s1, 32, %s26, [#allocation3]
    $region9: #{tpu_custom_call.1} parent=1 // pred_fallthru
      _
    // Predicated region
    $region10: #{tpu_custom_call.1} parent=1 // pred_check
      _
    $region11: #{tpu_custom_call.1} parent=1 // pred_check_branch
      %30 = sbr.rel (0) target = $region13
    $region12: #{tpu_custom_call.1} parent=1 // pred_region
      _
    $region13: #{tpu_custom_call.1} parent=1 // pred_fallthru
      _
    // Predicated region
    $region14: #{tpu_custom_call.1} parent=1 // pred_check
      _
    $region15: #{tpu_custom_call.1} parent=1 // pred_check_branch
      %32 = sbr.rel (0) target = $region17
    $region16: #{tpu_custom_call.1} parent=1 // pred_region
      %33 = dma.done [#allocation5], 16
    $region17: #{tpu_custom_call.1} parent=1 // pred_fallthru
      _
    // Predicated region
    $region18: #{tpu_custom_call.1} parent=1 // pred_check
      _
    $region19: #{tpu_custom_call.1} parent=1 // pred_check_branch
      %35 = sbr.rel (0) target = $region21
    $region20: #{tpu_custom_call.1} parent=1 // pred_region
      %36 = dma.done [#allocation3], 32
    $region21: #{tpu_custom_call.1} parent=1 // pred_fallthru
      _
    %37 = sfence
    %v38 = vld [vmem:[#allocation6] sm:$0x3]
    %v39 = vld [vmem:[%s2] sm:$0x3]
    %v40 = vadd.f32 %v38, %v39
    %42 = vrot.lane.b32.xlu0 %v40, 1
    %v43 = vpop.permute.xlu0 %42
    %vm45 = vcmask 7168
    %v46 = vsel %vm45, 0.0, %v43
    %v47 = vsel %vm45, %v43, 0.0
    %s48 = sld [smem:[#allocation2]]
    %v49 = vstv %s48
    %v50 = vmul.f32 %v49, %v46
    %v51 = vadd.f32 %v50, 0.0
    %s52 = sld [smem:[#allocation2 + $0x1]]
    %v53 = vstv %s52
    %v54 = vmul.f32 %v53, %v46
    %v55 = vmul.f32 %v53, %v47
    %58 = vrot.lane.b32.xlu0 %v54, 127
    %v59 = vpop.permute.xlu0 %58
    %60 = vrot.lane.b32.xlu0 %v55, 127
    %v61 = vpop.permute.xlu0 %60
    %vm62 = vcmask 1039360
    %v63 = vsel %vm62, %v59, %v61
    %v65 = vadd.f32 %v51, %v63
    %s66 = sld [smem:[#allocation2 + $0x2]]
    %v67 = vstv %s66
    %v68 = vmul.f32 %v67, %v46
    %v69 = vmul.f32 %v67, %v47
    %72 = vrot.lane.b32.xlu0 %v68, 126
    %v73 = vpop.permute.xlu0 %72
    %74 = vrot.lane.b32.xlu0 %v69, 126
    %v75 = vpop.permute.xlu0 %74
    %vm76 = vcmask 1031168
    %v77 = vsel %vm76, %v73, %v75
    %v79 = vadd.f32 %v65, %v77
    %v80 = vxor.u32 %v79, 2147483648
    %v81 = vmul.f32 %v80, 1.442695
    %v82 = vpow.pop %v81
    %v83 = vadd.f32 %v82, 1.0
    %v84 = vrcp.pop %v83
    %v85 = vmul.f32 1.0, %v84
    %86 = vst [vmem:[#allocation7] sm:$0x3] %v85
    // Predicated region
    $region22: #{tpu_custom_call.1} parent=1 // pred_check
      _
    $region23: #{tpu_custom_call.1} parent=1 // pred_check_branch
      %88 = sbr.rel (0) target = $region25
    $region24: #{tpu_custom_call.1} parent=1 // pred_region
      %s90 = ssub.s32 32, 32
      %91 = vsyncadd [#allocation4], %s90
      %s93 = sshll.u32 [#allocation7], 4
      %s94 = int_to_ptr.vmem [resolvable:$true] %s93
      %96 = dma.vmem_to_hbm [thread:$0]  %s94, 32, %s3, [#allocation4]
    $region25: #{tpu_custom_call.1} parent=1 // pred_fallthru
      _
    // Predicated region
    $region26: #{tpu_custom_call.1} parent=1 // pred_check
      _
    $region27: #{tpu_custom_call.1} parent=1 // pred_check_branch
      %98 = sbr.rel (0) target = $region29
    $region28: #{tpu_custom_call.1} parent=1 // pred_region
      %99 = dma.done [#allocation4], 32
    $region29: #{tpu_custom_call.1} parent=1 // pred_fallthru
      _
    %100 = vsyncpa [#allocation3], 1
    %101 = vsyncpa [#allocation4], 1
    %102 = vsyncpa [#allocation5], 1

</llo_original>
